<compile_context>
chip_gen: v6e
topology: v6e:2x2x1
jax: 0.10.0
libtpu: 0.0.40
codegen_flags: <defaults>
</compile_context>

<pallas_src>
import functools

import jax
import jax.numpy as jnp
from jax.experimental import pallas as pl
from jax.experimental.pallas import tpu as pltpu


# ---------------------------------------------------------------------------
# Kernel 1: fused softmax + foreground mask + |fg - p| error, emitted as one
# packed sort key per (class, pixel), plus per-tile foreground sums.
# Grid: (B, num_hw_tiles) over the untransposed (B, C, HW_pad) logits.
# ---------------------------------------------------------------------------
def errors_kernel(logits_ref, labels_ref, key_ref, fgsum_ref):
    x = logits_ref[...].astype(jnp.float32)               # [C, T]
    labels = labels_ref[...]                               # [1, T] i32 (-1 = pad)
    C, T = x.shape

    # Numerically-stable softmax over the class (sublane) axis.  Divide moved
    # to the EUP (approx reciprocal) + one Newton step on the VPU.
    m = jnp.max(x, axis=0, keepdims=True)                  # [1, T]
    e = jnp.exp(x - m)                                     # EUP
    denom = jnp.sum(e, axis=0, keepdims=True)              # [1, T]
    r = pl.reciprocal(denom, approx=True)
    r = r * (2.0 - denom * r)                              # Newton step -> ~f32-exact
    p = e * r                                              # [C, T]

    class_ids = jax.lax.broadcasted_iota(jnp.int32, (C, T), 0)
    is_fg = labels == class_ids                            # [C, T] bool
    valid = labels >= 0                                    # [1, T] bool (padding mask)
    fg_i = is_fg.astype(jnp.int32)

    err = jnp.where(is_fg, 1.0 - p, p)                     # == |fg - p|
    err = jnp.where(valid, err, 0.0)                       # padded pixels -> 0 (sort last, contribute 0)

    # Pack fg into the mantissa LSB of the negated error: ascending sort of the
    # key == descending sort of err.  (Zero-error fg pixels become a denormal
    # key; the sort only compares/permutes so the fg bit survives, and their
    # loss contribution is 0 anyway.)
    neg_bits = pltpu.bitcast(-err, jnp.int32)              # bits of -err
    key_bits = (neg_bits & jnp.int32(-2)) | fg_i
    key_ref[...] = pltpu.bitcast(key_bits, jnp.float32)

    # Per-tile per-class fg totals, written lane-dense (sum in lane 0).
    s = jnp.sum(fg_i.astype(jnp.float32), axis=1, keepdims=True)   # [C, 1]
    lane = jax.lax.broadcasted_iota(jnp.int32, (C, 128), 1)
    fgsum_ref[...] = jnp.where(lane == 0, s, 0.0)


# ---------------------------------------------------------------------------
# Kernel 2: Lovász gradient as a carried scan over the globally sorted keys.
# ---------------------------------------------------------------------------
def lovasz_kernel(key_ref, gts_ref, loss_ref, cum_ref, prevjac_ref, acc_ref):
    t = pl.program_id(0)

    @pl.when(t == 0)
    def _init():
        cum_ref[...] = jnp.zeros_like(cum_ref)
        prevjac_ref[...] = jnp.zeros_like(prevjac_ref)
        acc_ref[...] = jnp.zeros_like(acc_ref)

    # Unpack fg (LSB) and err (remaining bits, negated back) from the key.
    bits = pltpu.bitcast(key_ref[...], jnp.int32)          # [C, T]
    fg = (bits & 1).astype(jnp.float32)                    # [C, T]
    err = -pltpu.bitcast(bits & jnp.int32(-2), jnp.float32)  # [C, T] (sorted desc)
    gts = gts_ref[...]                                     # [C, 1] full-P totals
    C, T = fg.shape

    col = jax.lax.broadcasted_iota(jnp.int32, (C, T), 1)   # hoisted, reused below

    # Per-tile inclusive cumsum along lanes: Hillis–Steele scan (XLU rolls +
    # VPU adds/selects); exact since fg is 0/1.
    # TODO(synk): for tiles >4K a hierarchical (per-128-lane chunk) scan would
    # cut the number of cross-vreg rolls; at tile_scan=2048 it is not needed.
    cum_local = fg
    off = 1
    while off < T:                                         # static, fully unrolled
        shifted = pltpu.roll(cum_local, shift=off, axis=1)
        cum_local = cum_local + jnp.where(col >= off, shifted, 0.0)
        off *= 2

    carry = cum_ref[...]                                   # [C, 1]
    cum_fg = cum_local + carry                             # [C, T]

    # TODO(synk): cum_fg/pos/gts are f32-exact only up to 2^24 pixels; switch
    # the carries to int32 if P > ~16.7M is ever expected.
    base = t * T
    pos = (col + (base + 1)).astype(jnp.float32)           # global 1-based index

    intersection = gts - cum_fg
    union = gts + (pos - cum_fg)                           # >= 1 everywhere
    jaccard = 1.0 - intersection * pl.reciprocal(union, approx=False)

    # First difference along P with a cross-tile carry of the previous jaccard.
    prev = pltpu.roll(jaccard, shift=1, axis=1)
    prev = jnp.where(col == 0, prevjac_ref[...], prev)
    grad = jaccard - prev

    acc_ref[...] += jnp.sum(err * grad, axis=1, keepdims=True)          # [C, 1]

    # Update carries; the boundary jaccard is recomputed from the carried
    # cumulative sum (exact) to avoid a lane extract.
    new_cum = carry + jnp.sum(fg, axis=1, keepdims=True)                # [C, 1]
    cum_ref[...] = new_cum
    pos_last = (base + T).astype(jnp.float32)
    last_union = gts + (pos_last - new_cum)
    prevjac_ref[...] = 1.0 - (gts - new_cum) * pl.reciprocal(last_union, approx=False)

    @pl.when(t == pl.num_programs(0) - 1)
    def _finalize():
        present = (gts > 0.0).astype(jnp.float32)          # classes='present'
        loss = jnp.sum(acc_ref[...] * present) / jnp.sum(present)
        loss_ref[...] = loss.reshape(1, 1)


# ---------------------------------------------------------------------------
# Wrapper
# ---------------------------------------------------------------------------
def softmax_lovasz_loss(logits, targets, *, tile_hw=8192, tile_scan=2048):
    """Lovász-Softmax loss (classes='present', per_image=False)."""
    B, C, H, W = logits.shape
    HW = H * W

    # Kernel-1 tile: as large as the image allows (amortizes per-step overhead,
    # full-width lane-dense DMAs); fits comfortably in default scoped VMEM on
    # v5e/v6e/v7x even at C~24 with double buffering.
    hw128 = pl.cdiv(HW, 128) * 128
    t1 = min(tile_hw, hw128)                     # multiple of 128
    hw_pad = pl.cdiv(HW, t1) * t1
    num_hw = hw_pad // t1
    P_pad = B * hw_pad

    # Kernel-2 scan tile: decoupled, moderate; must divide hw_pad (=> P_pad).
    t2 = min(tile_scan, hw_pad)
    if hw_pad % t2 != 0:
        t2 = hw_pad
    num_t2 = P_pad // t2

    # Free reshape (contiguous) — no XLA transpose of the logits.
    x = logits.reshape(B, C, HW)
    labels = targets.reshape(B, 1, HW).astype(jnp.int32)
    if hw_pad != HW:
        x = jnp.pad(x, ((0, 0), (0, 0), (0, hw_pad - HW)))
        labels = jnp.pad(labels, ((0, 0), (0, 0), (0, hw_pad - HW)),
                         constant_values=-1)

    n1 = B * num_hw
    key, fgsum = pl.pallas_call(
        errors_kernel,
        out_shape=(jax.ShapeDtypeStruct((C, P_pad), jnp.float32),
                   jax.ShapeDtypeStruct((C, n1 * 128), jnp.float32)),
        grid=(B, num_hw),
        in_specs=[pl.BlockSpec((None, C, t1), lambda b, i: (b, 0, i)),
                  pl.BlockSpec((None, 1, t1), lambda b, i: (b, 0, i))],
        out_specs=(pl.BlockSpec((C, t1), lambda b, i: (0, b * num_hw + i)),
                   pl.BlockSpec((C, 128), lambda b, i: (0, b * num_hw + i))),
        compiler_params=pltpu.CompilerParams(
            dimension_semantics=("parallel", "parallel")),
    )(x, labels)

    # Per-class foreground totals from the fused per-tile sums (tiny reduce).
    gts = jnp.sum(fgsum, axis=1, keepdims=True)            # [C, 1]

    # Global per-class descending sort by error == ascending sort of the packed
    # key; single-operand sort (half the payload of the old (err, fg) co-sort).
    # TODO(synk): no Pallas TPU sort primitive; this stays in XLA.
    key_sorted = jax.lax.sort(key, dimension=1)

    # TODO(synk): on v7x the scan could be split across both TensorCores by
    # computing per-tile fg prefixes from the sorted keys in XLA and emitting
    # per-tile partial dots; kept serial here since it reads the data once.
    loss = pl.pallas_call(
        lovasz_kernel,
        out_shape=jax.ShapeDtypeStruct((1, 1), jnp.float32),
        grid=(num_t2,),
        in_specs=[pl.BlockSpec((C, t2), lambda i: (0, i)),
                  pl.BlockSpec((C, 1), lambda i: (0, 0))],
        out_specs=pl.BlockSpec((1, 1), lambda i: (0, 0)),
        scratch_shapes=[pltpu.VMEM((C, 1), jnp.float32),   # cumulative-fg carry
                        pltpu.VMEM((C, 1), jnp.float32),   # previous-jaccard carry
                        pltpu.VMEM((C, 1), jnp.float32)],  # per-class dot accumulator
        compiler_params=pltpu.CompilerParams(
            dimension_semantics=("arbitrary",)),
    )(key_sorted, gts)
    return loss[0, 0]


# ---------------------------------------------------------------------------
# Pure-JAX reference (lovasz_softmax with F.softmax, classes='present')
# ---------------------------------------------------------------------------
def lovasz_softmax_ref(logits, targets):
    B, C, H, W = logits.shape
    probas = jax.nn.softmax(logits.astype(jnp.float32), axis=1)
    probas = jnp.transpose(probas, (0, 2, 3, 1)).reshape(-1, C)
    labels = targets.reshape(-1)
    losses, present = [], []
    for c in range(C):
        fg = (labels == c).astype(jnp.float32)
        errs = jnp.abs(fg - probas[:, c])
        order = jnp.argsort(-errs)
        errs_s = errs[order]
        fg_s = fg[order]
        gts = fg_s.sum()
        inter = gts - jnp.cumsum(fg_s)
        union = gts + jnp.cumsum(1.0 - fg_s)
        jac = 1.0 - inter / union
        grad = jnp.concatenate([jac[:1], jac[1:] - jac[:-1]])
        losses.append(jnp.dot(errs_s, grad))
        present.append(gts > 0)
    losses = jnp.stack(losses)
    present = jnp.stack(present).astype(jnp.float32)
    return jnp.sum(losses * present) / jnp.sum(present)


if __name__ == "__main__":
    key = jax.random.PRNGKey(0)
    k1, k2, k3, k4 = jax.random.split(key, 4)

    B, C, H, W = 2, 4, 16, 16
    logits = jax.random.normal(k1, (B, C, H, W), dtype=jnp.float32)
    targets = jax.random.randint(k2, (B, H, W), 0, C, dtype=jnp.int32)

    # Default tiles (one hw-tile per image here, 2-tile scan).
    loss_fn = jax.jit(softmax_lovasz_loss)
    loss = jax.block_until_ready(loss_fn(logits, targets))
    ref = lovasz_softmax_ref(logits, targets)
    assert jnp.allclose(loss, ref, atol=1e-5, rtol=1e-4), (loss, ref)

    # Small tiles: exercises the (B, num_hw) relayout indexing and all the
    # cross-tile carries (cum_fg / prev-jaccard / dot accumulator).
    loss_fn_small = jax.jit(functools.partial(softmax_lovasz_loss,
                                              tile_hw=128, tile_scan=128))
    loss_s = jax.block_until_ready(loss_fn_small(logits, targets))
    assert jnp.allclose(loss_s, ref, atol=1e-5, rtol=1e-4), (loss_s, ref)

    # Non-tile-multiple spatial size exercises the padding path.
    B2, H2, W2 = 2, 15, 15                     # HW = 225 -> padded to 256
    logits2 = jax.random.normal(k3, (B2, C, H2, W2), dtype=jnp.float32)
    targets2 = jax.random.randint(k4, (B2, H2, W2), 0, C, dtype=jnp.int32)
    loss2 = jax.block_until_ready(loss_fn_small(logits2, targets2))
    ref2 = lovasz_softmax_ref(logits2, targets2)
    assert jnp.allclose(loss2, ref2, atol=1e-5, rtol=1e-4), (loss2, ref2)

    print("KERNEL_OK")
</pallas_src>

<mosaic_0001>
module attributes {stable_mosaic.version = 11 : i64} {
  func.func @errors_kernel(%arg0: i32, %arg1: i32, %arg2: memref<1x4x256xf32, #tpu.memory_space<vmem>>, %arg3: memref<1x1x256xi32, #tpu.memory_space<vmem>>, %arg4: memref<4x256xf32, #tpu.memory_space<vmem>>, %arg5: memref<4x128xf32, #tpu.memory_space<vmem>>) attributes {dimension_semantics = [#tpu.dimension_semantics<parallel>, #tpu.dimension_semantics<parallel>], iteration_bounds = array<i64: 2, 1>, scalar_prefetch = 0 : i64, scratch_operands = 0 : i64, tpu.core_type = #tpu.core_type<tc>, window_params = [{transform_indices = @transform_0, window_bounds = array<i64: 1, 4, 256>}, {transform_indices = @transform_1, window_bounds = array<i64: 1, 1, 256>}, {transform_indices = @transform_2, window_bounds = array<i64: 4, 256>}, {transform_indices = @transform_3, window_bounds = array<i64: 4, 128>}]} {
    %c0 = arith.constant 0 : index
    %c0_0 = arith.constant 0 : index
    %c0_1 = arith.constant 0 : index
    %0 = vector.load %arg2[%c0, %c0_0, %c0_1] : memref<1x4x256xf32, #tpu.memory_space<vmem>>, vector<1x4x256xf32>
    %1 = vector.shape_cast %0 : vector<1x4x256xf32> to vector<4x256xf32>
    %c0_2 = arith.constant 0 : index
    %c0_3 = arith.constant 0 : index
    %c0_4 = arith.constant 0 : index
    %2 = vector.load %arg3[%c0_2, %c0_3, %c0_4] : memref<1x1x256xi32, #tpu.memory_space<vmem>>, vector<1x1x256xi32>
    %3 = vector.shape_cast %2 : vector<1x1x256xi32> to vector<1x256xi32>
    %cst = arith.constant dense<0xFF800000> : vector<256xf32>
    %4 = vector.multi_reduction <maximumf>, %1, %cst [0] : vector<4x256xf32> to vector<256xf32>
    %5 = vector.shape_cast %4 : vector<256xf32> to vector<1x256xf32>
    %6 = vector.broadcast %5 : vector<1x256xf32> to vector<4x256xf32>
    %7 = arith.subf %1, %6 : vector<4x256xf32>
    %8 = math.exp %7 : vector<4x256xf32>
    %cst_5 = arith.constant dense<0.000000e+00> : vector<256xf32>
    %9 = vector.multi_reduction <add>, %8, %cst_5 [0] : vector<4x256xf32> to vector<256xf32>
    %10 = vector.shape_cast %9 : vector<256xf32> to vector<1x256xf32>
    %11 = tpu.reciprocal %10 {approx = true} : vector<1x256xf32> -> vector<1x256xf32>
    %12 = arith.mulf %10, %11 : vector<1x256xf32>
    %cst_6 = arith.constant 2.000000e+00 : f32
    %13 = vector.broadcast %cst_6 : f32 to vector<1x256xf32>
    %14 = arith.subf %13, %12 : vector<1x256xf32>
    %15 = arith.mulf %11, %14 : vector<1x256xf32>
    %16 = vector.broadcast %15 : vector<1x256xf32> to vector<4x256xf32>
    %17 = arith.mulf %8, %16 : vector<4x256xf32>
    %18 = tpu.iota {dimensions = array<i32: 0>} : vector<4x256xi32>
    %19 = vector.broadcast %3 : vector<1x256xi32> to vector<4x256xi32>
    %20 = arith.cmpi eq, %19, %18 : vector<4x256xi32>
    %c0_i32 = arith.constant 0 : i32
    %21 = vector.broadcast %c0_i32 : i32 to vector<1x256xi32>
    %22 = arith.cmpi sge, %3, %21 : vector<1x256xi32>
    %23 = arith.extui %20 : vector<4x256xi1> to vector<4x256xi32>
    %cst_7 = arith.constant 1.000000e+00 : f32
    %24 = vector.broadcast %cst_7 : f32 to vector<4x256xf32>
    %25 = arith.subf %24, %17 : vector<4x256xf32>
    %26 = arith.select %20, %25, %17 : vector<4x256xi1>, vector<4x256xf32>
    %cst_8 = arith.constant 0.000000e+00 : f32
    %27 = vector.shape_cast %22 : vector<1x256xi1> to vector<1x256xi1>
    %28 = vector.broadcast %27 : vector<1x256xi1> to vector<4x256xi1>
    %29 = vector.broadcast %cst_8 : f32 to vector<4x256xf32>
    %30 = arith.select %28, %26, %29 : vector<4x256xi1>, vector<4x256xf32>
    %cst_9 = arith.constant 0.000000e+00 : f32
    %31 = vector.broadcast %cst_9 : f32 to vector<4x256xf32>
    %32 = arith.subf %31, %30 : vector<4x256xf32>
    %33 = tpu.bitcast %32 : vector<4x256xf32> -> vector<4x256xi32>
    %c-2_i32 = arith.constant -2 : i32
    %34 = vector.broadcast %c-2_i32 : i32 to vector<4x256xi32>
    %35 = arith.andi %33, %34 : vector<4x256xi32>
    %36 = arith.ori %35, %23 : vector<4x256xi32>
    %37 = tpu.bitcast %36 : vector<4x256xi32> -> vector<4x256xf32>
    %c0_10 = arith.constant 0 : index
    %c0_11 = arith.constant 0 : index
    %38 = vector.load %arg4[%c0_10, %c0_11] : memref<4x256xf32, #tpu.memory_space<vmem>>, vector<4x256xf32>
    tpu.vector_store %arg4[%c0_10, %c0_11], %37 {strides = array<i32>} : memref<4x256xf32, #tpu.memory_space<vmem>>, vector<4x256xf32>,
    %39 = arith.sitofp %23 : vector<4x256xi32> to vector<4x256xf32>
    %cst_12 = arith.constant dense<0.000000e+00> : vector<4xf32>
    %40 = vector.multi_reduction <add>, %39, %cst_12 [1] : vector<4x256xf32> to vector<4xf32>
    %41 = vector.shape_cast %40 : vector<4xf32> to vector<4x1xf32>
    %42 = tpu.iota {dimensions = array<i32: 1>} : vector<4x128xi32>
    %c0_i32_13 = arith.constant 0 : i32
    %43 = vector.broadcast %c0_i32_13 : i32 to vector<4x128xi32>
    %44 = arith.cmpi eq, %42, %43 : vector<4x128xi32>
    %cst_14 = arith.constant 0.000000e+00 : f32
    %45 = vector.shape_cast %41 : vector<4x1xf32> to vector<4x1xf32>
    %46 = vector.broadcast %45 : vector<4x1xf32> to vector<4x128xf32>
    %47 = vector.broadcast %cst_14 : f32 to vector<4x128xf32>
    %48 = arith.select %44, %46, %47 : vector<4x128xi1>, vector<4x128xf32>
    %c0_15 = arith.constant 0 : index
    %c0_16 = arith.constant 0 : index
    %49 = vector.load %arg5[%c0_15, %c0_16] : memref<4x128xf32, #tpu.memory_space<vmem>>, vector<4x128xf32>
    tpu.vector_store %arg5[%c0_15, %c0_16], %48 {strides = array<i32>} : memref<4x128xf32, #tpu.memory_space<vmem>>, vector<4x128xf32>,
    return
  }
  func.func @transform_0(%arg0: i32, %arg1: i32) -> (i32, i32, i32) {
    %c0_i32 = arith.constant 0 : i32
    %c0_i32_0 = arith.constant 0 : i32
    return %arg0, %c0_i32, %arg1 : i32, i32, i32
  }
  func.func @transform_1(%arg0: i32, %arg1: i32) -> (i32, i32, i32) {
    %c0_i32 = arith.constant 0 : i32
    %c0_i32_0 = arith.constant 0 : i32
    return %arg0, %c0_i32, %arg1 : i32, i32, i32
  }
  func.func @transform_2(%arg0: i32, %arg1: i32) -> (i32, i32) {
    %c1_i32 = arith.constant 1 : i32
    %0 = arith.muli %arg0, %c1_i32 : i32
    %1 = arith.addi %0, %arg1 : i32
    %c0_i32 = arith.constant 0 : i32
    %c0_i32_0 = arith.constant 0 : i32
    return %c0_i32, %1 : i32, i32
  }
  func.func @transform_3(%arg0: i32, %arg1: i32) -> (i32, i32) {
    %c1_i32 = arith.constant 1 : i32
    %0 = arith.muli %arg0, %c1_i32 : i32
    %1 = arith.addi %0, %arg1 : i32
    %c0_i32 = arith.constant 0 : i32
    %c0_i32_0 = arith.constant 0 : i32
    return %c0_i32, %1 : i32, i32
  }
}

module attributes {stable_mosaic.version = 11 : i64} {
  func.func @lovasz_kernel(%arg0: i32, %arg1: memref<4x256xf32, #tpu.memory_space<vmem>>, %arg2: memref<4x1xf32, #tpu.memory_space<vmem>>, %arg3: memref<1x1xf32, #tpu.memory_space<vmem>>, %arg4: memref<4x1xf32, #tpu.memory_space<vmem>>, %arg5: memref<4x1xf32, #tpu.memory_space<vmem>>, %arg6: memref<4x1xf32, #tpu.memory_space<vmem>>) attributes {dimension_semantics = [#tpu.dimension_semantics<arbitrary>], iteration_bounds = array<i64: 2>, scalar_prefetch = 0 : i64, scratch_operands = 3 : i64, tpu.core_type = #tpu.core_type<tc>, window_params = [{transform_indices = @transform_0, window_bounds = array<i64: 4, 256>}, {pipeline_mode = #tpu.pipeline_mode<synchronous>, transform_indices = @transform_1, window_bounds = array<i64: 4, 1>}, {pipeline_mode = #tpu.pipeline_mode<synchronous>, transform_indices = @transform_2, window_bounds = array<i64: 1, 1>}]} {
    %c0_i32 = arith.constant 0 : i32
    %0 = arith.cmpi eq, %arg0, %c0_i32 : i32
    %1 = arith.extui %0 : i1 to i32
    %c0_i32_0 = arith.constant 0 : i32
    %2 = arith.cmpi ne, %1, %c0_i32_0 : i32
    scf.if %2 {
      %cst_43 = arith.constant 0.000000e+00 : f32
      %112 = vector.broadcast %cst_43 : f32 to vector<4x1xf32>
      %c0_44 = arith.constant 0 : index
      %c0_45 = arith.constant 0 : index
      %113 = vector.load %arg4[%c0_44, %c0_45] : memref<4x1xf32, #tpu.memory_space<vmem>>, vector<4x1xf32>
      tpu.vector_store %arg4[%c0_44, %c0_45], %112 {strides = array<i32>} : memref<4x1xf32, #tpu.memory_space<vmem>>, vector<4x1xf32>,
      %cst_46 = arith.constant 0.000000e+00 : f32
      %114 = vector.broadcast %cst_46 : f32 to vector<4x1xf32>
      %c0_47 = arith.constant 0 : index
      %c0_48 = arith.constant 0 : index
      %115 = vector.load %arg5[%c0_47, %c0_48] : memref<4x1xf32, #tpu.memory_space<vmem>>, vector<4x1xf32>
      tpu.vector_store %arg5[%c0_47, %c0_48], %114 {strides = array<i32>} : memref<4x1xf32, #tpu.memory_space<vmem>>, vector<4x1xf32>,
      %cst_49 = arith.constant 0.000000e+00 : f32
      %116 = vector.broadcast %cst_49 : f32 to vector<4x1xf32>
      %c0_50 = arith.constant 0 : index
      %c0_51 = arith.constant 0 : index
      %117 = vector.load %arg6[%c0_50, %c0_51] : memref<4x1xf32, #tpu.memory_space<vmem>>, vector<4x1xf32>
      tpu.vector_store %arg6[%c0_50, %c0_51], %116 {strides = array<i32>} : memref<4x1xf32, #tpu.memory_space<vmem>>, vector<4x1xf32>,
    } else {
    }
    %c0 = arith.constant 0 : index
    %c0_1 = arith.constant 0 : index
    %3 = vector.load %arg1[%c0, %c0_1] : memref<4x256xf32, #tpu.memory_space<vmem>>, vector<4x256xf32>
    %4 = tpu.bitcast %3 : vector<4x256xf32> -> vector<4x256xi32>
    %c1_i32 = arith.constant 1 : i32
    %5 = vector.broadcast %c1_i32 : i32 to vector<4x256xi32>
    %6 = arith.andi %4, %5 : vector<4x256xi32>
    %7 = arith.sitofp %6 : vector<4x256xi32> to vector<4x256xf32>
    %c-2_i32 = arith.constant -2 : i32
    %8 = vector.broadcast %c-2_i32 : i32 to vector<4x256xi32>
    %9 = arith.andi %4, %8 : vector<4x256xi32>
    %10 = tpu.bitcast %9 : vector<4x256xi32> -> vector<4x256xf32>
    %cst = arith.constant 0.000000e+00 : f32
    %11 = vector.broadcast %cst : f32 to vector<4x256xf32>
    %12 = arith.subf %11, %10 : vector<4x256xf32>
    %c0_2 = arith.constant 0 : index
    %c0_3 = arith.constant 0 : index
    %13 = vector.load %arg2[%c0_2, %c0_3] : memref<4x1xf32, #tpu.memory_space<vmem>>, vector<4x1xf32>
    %14 = tpu.iota {dimensions = array<i32: 1>} : vector<4x256xi32>
    %c1_i32_4 = arith.constant 1 : i32
    %15 = tpu.dynamic_rotate %7 by %c1_i32_4 dim 1 : vector<4x256xf32>, i32 -> vector<4x256xf32>
    %c1_i32_5 = arith.constant 1 : i32
    %16 = vector.broadcast %c1_i32_5 : i32 to vector<4x256xi32>
    %17 = arith.cmpi sge, %14, %16 : vector<4x256xi32>
    %cst_6 = arith.constant 0.000000e+00 : f32
    %18 = vector.broadcast %cst_6 : f32 to vector<4x256xf32>
    %19 = arith.select %17, %15, %18 : vector<4x256xi1>, vector<4x256xf32>
    %20 = arith.addf %7, %19 : vector<4x256xf32>
    %c2_i32 = arith.constant 2 : i32
    %21 = tpu.dynamic_rotate %20 by %c2_i32 dim 1 : vector<4x256xf32>, i32 -> vector<4x256xf32>
    %c2_i32_7 = arith.constant 2 : i32
    %22 = vector.broadcast %c2_i32_7 : i32 to vector<4x256xi32>
    %23 = arith.cmpi sge, %14, %22 : vector<4x256xi32>
    %cst_8 = arith.constant 0.000000e+00 : f32
    %24 = vector.broadcast %cst_8 : f32 to vector<4x256xf32>
    %25 = arith.select %23, %21, %24 : vector<4x256xi1>, vector<4x256xf32>
    %26 = arith.addf %20, %25 : vector<4x256xf32>
    %c4_i32 = arith.constant 4 : i32
    %27 = tpu.dynamic_rotate %26 by %c4_i32 dim 1 : vector<4x256xf32>, i32 -> vector<4x256xf32>
    %c4_i32_9 = arith.constant 4 : i32
    %28 = vector.broadcast %c4_i32_9 : i32 to vector<4x256xi32>
    %29 = arith.cmpi sge, %14, %28 : vector<4x256xi32>
    %cst_10 = arith.constant 0.000000e+00 : f32
    %30 = vector.broadcast %cst_10 : f32 to vector<4x256xf32>
    %31 = arith.select %29, %27, %30 : vector<4x256xi1>, vector<4x256xf32>
    %32 = arith.addf %26, %31 : vector<4x256xf32>
    %c8_i32 = arith.constant 8 : i32
    %33 = tpu.dynamic_rotate %32 by %c8_i32 dim 1 : vector<4x256xf32>, i32 -> vector<4x256xf32>
    %c8_i32_11 = arith.constant 8 : i32
    %34 = vector.broadcast %c8_i32_11 : i32 to vector<4x256xi32>
    %35 = arith.cmpi sge, %14, %34 : vector<4x256xi32>
    %cst_12 = arith.constant 0.000000e+00 : f32
    %36 = vector.broadcast %cst_12 : f32 to vector<4x256xf32>
    %37 = arith.select %35, %33, %36 : vector<4x256xi1>, vector<4x256xf32>
    %38 = arith.addf %32, %37 : vector<4x256xf32>
    %c16_i32 = arith.constant 16 : i32
    %39 = tpu.dynamic_rotate %38 by %c16_i32 dim 1 : vector<4x256xf32>, i32 -> vector<4x256xf32>
    %c16_i32_13 = arith.constant 16 : i32
    %40 = vector.broadcast %c16_i32_13 : i32 to vector<4x256xi32>
    %41 = arith.cmpi sge, %14, %40 : vector<4x256xi32>
    %cst_14 = arith.constant 0.000000e+00 : f32
    %42 = vector.broadcast %cst_14 : f32 to vector<4x256xf32>
    %43 = arith.select %41, %39, %42 : vector<4x256xi1>, vector<4x256xf32>
    %44 = arith.addf %38, %43 : vector<4x256xf32>
    %c32_i32 = arith.constant 32 : i32
    %45 = tpu.dynamic_rotate %44 by %c32_i32 dim 1 : vector<4x256xf32>, i32 -> vector<4x256xf32>
    %c32_i32_15 = arith.constant 32 : i32
    %46 = vector.broadcast %c32_i32_15 : i32 to vector<4x256xi32>
    %47 = arith.cmpi sge, %14, %46 : vector<4x256xi32>
    %cst_16 = arith.constant 0.000000e+00 : f32
    %48 = vector.broadcast %cst_16 : f32 to vector<4x256xf32>
    %49 = arith.select %47, %45, %48 : vector<4x256xi1>, vector<4x256xf32>
    %50 = arith.addf %44, %49 : vector<4x256xf32>
    %c64_i32 = arith.constant 64 : i32
    %51 = tpu.dynamic_rotate %50 by %c64_i32 dim 1 : vector<4x256xf32>, i32 -> vector<4x256xf32>
    %c64_i32_17 = arith.constant 64 : i32
    %52 = vector.broadcast %c64_i32_17 : i32 to vector<4x256xi32>
    %53 = arith.cmpi sge, %14, %52 : vector<4x256xi32>
    %cst_18 = arith.constant 0.000000e+00 : f32
    %54 = vector.broadcast %cst_18 : f32 to vector<4x256xf32>
    %55 = arith.select %53, %51, %54 : vector<4x256xi1>, vector<4x256xf32>
    %56 = arith.addf %50, %55 : vector<4x256xf32>
    %c128_i32 = arith.constant 128 : i32
    %57 = tpu.dynamic_rotate %56 by %c128_i32 dim 1 : vector<4x256xf32>, i32 -> vector<4x256xf32>
    %c128_i32_19 = arith.constant 128 : i32
    %58 = vector.broadcast %c128_i32_19 : i32 to vector<4x256xi32>
    %59 = arith.cmpi sge, %14, %58 : vector<4x256xi32>
    %cst_20 = arith.constant 0.000000e+00 : f32
    %60 = vector.broadcast %cst_20 : f32 to vector<4x256xf32>
    %61 = arith.select %59, %57, %60 : vector<4x256xi1>, vector<4x256xf32>
    %62 = arith.addf %56, %61 : vector<4x256xf32>
    %c0_21 = arith.constant 0 : index
    %c0_22 = arith.constant 0 : index
    %63 = vector.load %arg4[%c0_21, %c0_22] : memref<4x1xf32, #tpu.memory_space<vmem>>, vector<4x1xf32>
    %64 = vector.broadcast %63 : vector<4x1xf32> to vector<4x256xf32>
    %65 = arith.addf %62, %64 : vector<4x256xf32>
    %c256_i32 = arith.constant 256 : i32
    %66 = arith.muli %arg0, %c256_i32 : i32
    %c1_i32_23 = arith.constant 1 : i32
    %67 = arith.addi %66, %c1_i32_23 : i32
    %68 = vector.broadcast %67 : i32 to vector<4x256xi32>
    %69 = arith.addi %14, %68 : vector<4x256xi32>
    %70 = arith.sitofp %69 : vector<4x256xi32> to vector<4x256xf32>
    %71 = vector.broadcast %13 : vector<4x1xf32> to vector<4x256xf32>
    %72 = arith.subf %71, %65 : vector<4x256xf32>
    %73 = arith.subf %70, %65 : vector<4x256xf32>
    %74 = vector.broadcast %13 : vector<4x1xf32> to vector<4x256xf32>
    %75 = arith.addf %74, %73 : vector<4x256xf32>
    %76 = tpu.reciprocal %75 : vector<4x256xf32> -> vector<4x256xf32>
    %77 = arith.mulf %72, %76 : vector<4x256xf32>
    %cst_24 = arith.constant 1.000000e+00 : f32
    %78 = vector.broadcast %cst_24 : f32 to vector<4x256xf32>
    %79 = arith.subf %78, %77 : vector<4x256xf32>
    %c1_i32_25 = arith.constant 1 : i32
    %80 = tpu.dynamic_rotate %79 by %c1_i32_25 dim 1 : vector<4x256xf32>, i32 -> vector<4x256xf32>
    %c0_i32_26 = arith.constant 0 : i32
    %81 = vector.broadcast %c0_i32_26 : i32 to vector<4x256xi32>
    %82 = arith.cmpi eq, %14, %81 : vector<4x256xi32>
    %c0_27 = arith.constant 0 : index
    %c0_28 = arith.constant 0 : index
    %83 = vector.load %arg5[%c0_27, %c0_28] : memref<4x1xf32, #tpu.memory_space<vmem>>, vector<4x1xf32>
    %84 = vector.shape_cast %83 : vector<4x1xf32> to vector<4x1xf32>
    %85 = vector.broadcast %84 : vector<4x1xf32> to vector<4x256xf32>
    %86 = arith.select %82, %85, %80 : vector<4x256xi1>, vector<4x256xf32>
    %87 = arith.subf %79, %86 : vector<4x256xf32>
    %c0_29 = arith.constant 0 : index
    %c0_30 = arith.constant 0 : index
    %88 = vector.load %arg6[%c0_29, %c0_30] : memref<4x1xf32, #tpu.memory_space<vmem>>, vector<4x1xf32>
    %89 = arith.mulf %12, %87 : vector<4x256xf32>
    %cst_31 = arith.constant dense<0.000000e+00> : vector<4xf32>
    %90 = vector.multi_reduction <add>, %89, %cst_31 [1] : vector<4x256xf32> to vector<4xf32>
    %91 = vector.shape_cast %90 : vector<4xf32> to vector<4x1xf32>
    %92 = arith.addf %88, %91 : vector<4x1xf32>
    %c0_32 = arith.constant 0 : index
    %c0_33 = arith.constant 0 : index
    %93 = vector.load %arg6[%c0_32, %c0_33] : memref<4x1xf32, #tpu.memory_space<vmem>>, vector<4x1xf32>
    tpu.vector_store %arg6[%c0_32, %c0_33], %92 {strides = array<i32>} : memref<4x1xf32, #tpu.memory_space<vmem>>, vector<4x1xf32>,
    %cst_34 = arith.constant dense<0.000000e+00> : vector<4xf32>
    %94 = vector.multi_reduction <add>, %7, %cst_34 [1] : vector<4x256xf32> to vector<4xf32>
    %95 = vector.shape_cast %94 : vector<4xf32> to vector<4x1xf32>
    %96 = arith.addf %63, %95 : vector<4x1xf32>
    %c0_35 = arith.constant 0 : index
    %c0_36 = arith.constant 0 : index
    %97 = vector.load %arg4[%c0_35, %c0_36] : memref<4x1xf32, #tpu.memory_space<vmem>>, vector<4x1xf32>
    tpu.vector_store %arg4[%c0_35, %c0_36], %96 {strides = array<i32>} : memref<4x1xf32, #tpu.memory_space<vmem>>, vector<4x1xf32>,
    %c256_i32_37 = arith.constant 256 : i32
    %98 = arith.addi %66, %c256_i32_37 : i32
    %99 = arith.sitofp %98 : i32 to f32
    %100 = vector.broadcast %99 : f32 to vector<4x1xf32>
    %101 = arith.subf %100, %96 : vector<4x1xf32>
    %102 = arith.addf %13, %101 : vector<4x1xf32>
    %103 = arith.subf %13, %96 : vector<4x1xf32>
    %104 = tpu.reciprocal %102 : vector<4x1xf32> -> vector<4x1xf32>
    %105 = arith.mulf %103, %104 : vector<4x1xf32>
    %cst_38 = arith.constant 1.000000e+00 : f32
    %106 = vector.broadcast %cst_38 : f32 to vector<4x1xf32>
    %107 = arith.subf %106, %105 : vector<4x1xf32>
    %c0_39 = arith.constant 0 : index
    %c0_40 = arith.constant 0 : index
    %108 = vector.load %arg5[%c0_39, %c0_40] : memref<4x1xf32, #tpu.memory_space<vmem>>, vector<4x1xf32>
    tpu.vector_store %arg5[%c0_39, %c0_40], %107 {strides = array<i32>} : memref<4x1xf32, #tpu.memory_space<vmem>>, vector<4x1xf32>,
    %c1_i32_41 = arith.constant 1 : i32
    %109 = arith.cmpi eq, %arg0, %c1_i32_41 : i32
    %110 = arith.extui %109 : i1 to i32
    %c0_i32_42 = arith.constant 0 : i32
    %111 = arith.cmpi ne, %110, %c0_i32_42 : i32
    scf.if %111 {
      %cst_43 = arith.constant 0.000000e+00 : f32
      %112 = vector.broadcast %cst_43 : f32 to vector<4x1xf32>
      %113 = arith.cmpf ogt, %13, %112 : vector<4x1xf32>
      %114 = arith.extui %113 : vector<4x1xi1> to vector<4x1xi32>
      %115 = arith.sitofp %114 : vector<4x1xi32> to vector<4x1xf32>
      %c0_44 = arith.constant 0 : index
      %c0_45 = arith.constant 0 : index
      %116 = vector.load %arg6[%c0_44, %c0_45] : memref<4x1xf32, #tpu.memory_space<vmem>>, vector<4x1xf32>
      %117 = arith.mulf %116, %115 : vector<4x1xf32>
      %118 = vector.shape_cast %117 : vector<4x1xf32> to vector<1x4x1xf32>
      %cst_46 = arith.constant dense<0.000000e+00> : vector<1xf32>
      %119 = vector.multi_reduction <add>, %118, %cst_46 [1, 2] : vector<1x4x1xf32> to vector<1xf32>
      %120 = vector.shape_cast %119 : vector<1xf32> to vector<1x1x1xf32>
      %121 = vector.extract %120[0, 0, 0] : f32 from vector<1x1x1xf32>
      %122 = vector.shape_cast %115 : vector<4x1xf32> to vector<1x4x1xf32>
      %cst_47 = arith.constant dense<0.000000e+00> : vector<1xf32>
      %123 = vector.multi_reduction <add>, %122, %cst_47 [1, 2] : vector<1x4x1xf32> to vector<1xf32>
      %124 = vector.shape_cast %123 : vector<1xf32> to vector<1x1x1xf32>
      %125 = vector.extract %124[0, 0, 0] : f32 from vector<1x1x1xf32>
      %126 = arith.divf %121, %125 : f32
      %127 = vector.broadcast %126 : f32 to vector<1x1xf32>
      %c0_48 = arith.constant 0 : index
      %c0_49 = arith.constant 0 : index
      %128 = vector.load %arg3[%c0_48, %c0_49] : memref<1x1xf32, #tpu.memory_space<vmem>>, vector<1x1xf32>
      tpu.vector_store %arg3[%c0_48, %c0_49], %127 {strides = array<i32>} : memref<1x1xf32, #tpu.memory_space<vmem>>, vector<1x1xf32>,
    } else {
    }
    return
  }
  func.func @transform_0(%arg0: i32) -> (i32, i32) {
    %c0_i32 = arith.constant 0 : i32
    %c0_i32_0 = arith.constant 0 : i32
    return %c0_i32, %arg0 : i32, i32
  }
  func.func @transform_1(%arg0: i32) -> (i32, i32) {
    %c0_i32 = arith.constant 0 : i32
    %c0_i32_0 = arith.constant 0 : i32
    %c0_i32_1 = arith.constant 0 : i32
    return %c0_i32, %c0_i32_0 : i32, i32
  }
  func.func @transform_2(%arg0: i32) -> (i32, i32) {
    %c0_i32 = arith.constant 0 : i32
    %c0_i32_0 = arith.constant 0 : i32
    %c0_i32_1 = arith.constant 0 : i32
    return %c0_i32, %c0_i32_0 : i32, i32
  }
}

</mosaic_0001>

<llo_original>
// kernel: softmax_lovasz_loss.2
$region0: #{softmax_lovasz_loss.2}
  #allocation0 [shape = 'u32[]', space=smem, size = 0x4, offset = 0x4, fixed_abs, tag = 'smem constant byte address 0x4 - core index']
  #allocation1 [shape = 'u32[144,128]{1,0:T(1,128)}', space=vmem, size = 0x12000, scoped, tag = 'internal scratch']
  %s0 = inlined_call_operand.vmem [shape: f32[2,4,256], index: 0, kind: input, shape index: {}]
  %s1 = inlined_call_operand.vmem [shape: s32[2,1,256], index: 1, kind: input, shape index: {}]
  %s2 = inlined_call_operand.vmem [shape: f32[4,512], index: 2, kind: output, shape index: {0}]
  %s3 = inlined_call_operand.vmem [shape: f32[4,256], index: 3, kind: output, shape index: {1}]
  %4 = xla_tuple %s2, %s3
  %s5 = sld [smem:[#allocation0]]
  $region49: #{softmax_lovasz_loss.2} parent=0
    _
  %s7 = ssub.s32 1, %s5
  %s8 = scalar_select 0, %s7, %s5
  loop: start=0, step=1, limit=4
  $region2: #{softmax_lovasz_loss.2} parent=0 // loop_pre_header
    _
  $region3: #{softmax_lovasz_loss.2} parent=0 // loop_header
    %s10 = sphi 0, %s14
    %p11 = scmp.ge.s32.totalorder %s10, 4
    %s17 = sphi 0, %s29
    %s18 = sphi 0, %s25
    %s19 = sphi 0, %s17
    %s20 = sphi 0, %s18
    %s21 = sphi 0, %s19
    %s22 = sphi 0, %s20
    %s34 = sphi 0, %s36
    %s37 = sphi 0, %s34
    %s38 = sphi 0, %s37
    %s54 = sphi 0, %s38
    %s62 = sphi 0, %s64
    %s65 = sphi 0, %s62
    %s66 = sphi 0, %s65
    %s82 = sphi 0, %s66
    %s90 = sphi 0, %s92
    %s93 = sphi 0, %s90
    %s94 = sphi 0, %s93
    %s110 = sphi 0, %s94
    %s118 = sphi 0, %s120
    %s121 = sphi 0, %s118
    %s122 = sphi 0, %s121
    %s138 = sphi 0, %s122
  $region4: #{softmax_lovasz_loss.2} parent=0 // loop_header_branch
    %13 = sbr.rel (%p11) target = $region8
  $region5: #{softmax_lovasz_loss.2} parent=0 // loop_body
    %s15 = ssub.s32 %s10, 1
    %s16 = ssub.s32 %s10, 2
    %s23 = sadd.s32 1, %s18
    %p24 = scmp.ge.s32.totalorder %s23, 1
    %s25 = scalar_select %p24, 0, %s23
    %s26 = sadd.s32 1, %s17
    %s27 = scalar_select %p24, %s26, %s17
    %p28 = scmp.ge.s32.totalorder %s27, 2
    %s29 = scalar_select %p28, 0, %s27
    %s30 = ssub.s32 %s17, %s29
    %s31 = ssub.s32 %s18, %s25
    %s32 = sor.u32 %s30, %s31
    %p33 = scmp.eq.s32.totalorder %s32, 0
    %s35 = sadd.s32 %s34, 1
    %s36 = scalar_select %p33, %s34, %s35
    %p39 = pneg %p33
    %p40 = scmp.eq.s32.totalorder %s10, 1
    %p41 = por %p39, %p40
    %p42 = scmp.ne.s32.totalorder %s34, %s37
    %p43 = scmp.eq.s32.totalorder %s10, 0
    %p44 = por %p42, %p43
    %p45 = scmp.ne.s32.totalorder %s34, %s37
    %p46 = scmp.eq.s32.totalorder %s15, 1
    %p47 = por %p45, %p46
    %p48 = scmp.ne.s32.totalorder %s37, %s38
    %p49 = scmp.eq.s32.totalorder %s15, 0
    %p50 = por %p48, %p49
    %p51 = scmp.ne.s32.totalorder %s37, %s38
    %p52 = scmp.eq.s32.totalorder %s16, 1
    %p53 = por %p51, %p52
    %p55 = scmp.ne.s32.totalorder %s38, %s54
    %p56 = scmp.eq.s32.totalorder %s16, 0
    %p57 = por %p55, %p56
    %s58 = ssub.s32 %s17, %s29
    %s59 = ssub.s32 %s18, %s25
    %s60 = sor.u32 %s58, %s59
    %p61 = scmp.eq.s32.totalorder %s60, 0
    %s63 = sadd.s32 %s62, 1
    %s64 = scalar_select %p61, %s62, %s63
    %p67 = pneg %p61
    %p68 = scmp.eq.s32.totalorder %s10, 1
    %p69 = por %p67, %p68
    %p70 = scmp.ne.s32.totalorder %s62, %s65
    %p71 = scmp.eq.s32.totalorder %s10, 0
    %p72 = por %p70, %p71
    %p73 = scmp.ne.s32.totalorder %s62, %s65
    %p74 = scmp.eq.s32.totalorder %s15, 1
    %p75 = por %p73, %p74
    %p76 = scmp.ne.s32.totalorder %s65, %s66
    %p77 = scmp.eq.s32.totalorder %s15, 0
    %p78 = por %p76, %p77
    %p79 = scmp.ne.s32.totalorder %s65, %s66
    %p80 = scmp.eq.s32.totalorder %s16, 1
    %p81 = por %p79, %p80
    %p83 = scmp.ne.s32.totalorder %s66, %s82
    %p84 = scmp.eq.s32.totalorder %s16, 0
    %p85 = por %p83, %p84
    %s86 = sadd.s32 %s17, %s18
    %s87 = sadd.s32 %s29, %s25
    %s88 = ssub.s32 %s86, %s87
    %p89 = scmp.eq.s32.totalorder %s88, 0
    %s91 = sadd.s32 %s90, 1
    %s92 = scalar_select %p89, %s90, %s91
    %p95 = pneg %p89
    %p96 = scmp.eq.s32.totalorder %s10, 1
    %p97 = por %p95, %p96
    %p98 = scmp.ne.s32.totalorder %s90, %s93
    %p99 = scmp.eq.s32.totalorder %s10, 0
    %p100 = por %p98, %p99
    %p101 = scmp.ne.s32.totalorder %s90, %s93
    %p102 = scmp.eq.s32.totalorder %s15, 1
    %p103 = por %p101, %p102
    %p104 = scmp.ne.s32.totalorder %s93, %s94
    %p105 = scmp.eq.s32.totalorder %s15, 0
    %p106 = por %p104, %p105
    %p107 = scmp.ne.s32.totalorder %s93, %s94
    %p108 = scmp.eq.s32.totalorder %s16, 1
    %p109 = por %p107, %p108
    %p111 = scmp.ne.s32.totalorder %s94, %s110
    %p112 = scmp.eq.s32.totalorder %s16, 0
    %p113 = por %p111, %p112
    %s114 = sadd.s32 %s17, %s18
    %s115 = sadd.s32 %s29, %s25
    %s116 = ssub.s32 %s114, %s115
    %p117 = scmp.eq.s32.totalorder %s116, 0
    %s119 = sadd.s32 %s118, 1
    %s120 = scalar_select %p117, %s118, %s119
    %p123 = pneg %p117
    %p124 = scmp.eq.s32.totalorder %s10, 1
    %p125 = por %p123, %p124
    %p126 = scmp.ne.s32.totalorder %s118, %s121
    %p127 = scmp.eq.s32.totalorder %s10, 0
    %p128 = por %p126, %p127
    %p129 = scmp.ne.s32.totalorder %s118, %s121
    %p130 = scmp.eq.s32.totalorder %s15, 1
    %p131 = por %p129, %p130
    %p132 = scmp.ne.s32.totalorder %s121, %s122
    %p133 = scmp.eq.s32.totalorder %s15, 0
    %p134 = por %p132, %p133
    %p135 = scmp.ne.s32.totalorder %s121, %s122
    %p136 = scmp.eq.s32.totalorder %s16, 1
    %p137 = por %p135, %p136
    %p139 = scmp.ne.s32.totalorder %s122, %s138
    %p140 = scmp.eq.s32.totalorder %s16, 0
    %p141 = por %p139, %p140
    %p142 = scmp.le.s32.totalorder 1, %s10
    %p143 = scmp.lt.s32.totalorder %s10, 3
    %p144 = pnand %p142, %p143
    %p145 = pneg %p144
    // Predicated region
    $region9: #{softmax_lovasz_loss.2} parent=5 // pred_check
      _
    $region10: #{softmax_lovasz_loss.2} parent=5 // pred_check_branch
      %147 = sbr.rel (%p144) target = $region12
    $region11: #{softmax_lovasz_loss.2} parent=5 // pred_region
      %s148 = ssub.s32 %s10, 1
    $region12: #{softmax_lovasz_loss.2} parent=5 // pred_fallthru
      _
    %p149 = scmp.lt.s32.totalorder %s10, 2
    // Predicated region
    $region13: #{softmax_lovasz_loss.2} parent=5 // pred_check
      %p150 = pneg %p149
    $region14: #{softmax_lovasz_loss.2} parent=5 // pred_check_branch
      %152 = sbr.rel (%p150) target = $region16
    $region15: #{softmax_lovasz_loss.2} parent=5 // pred_region
      // Predicated region
      $region17: #{softmax_lovasz_loss.2} parent=15 // pred_check
        %p153 = pneg %p44
      $region18: #{softmax_lovasz_loss.2} parent=15 // pred_check_branch
        %155 = sbr.rel (%p153) target = $region20
      $region19: #{softmax_lovasz_loss.2} parent=15 // pred_region
        %s156 = smul.u32 2, %s18
        %p157 = scmp.lt.s32.totalorder %s17, 1
        %s158 = scalar_select %p157, %s17, 1
        %p159 = scmp.lt.s32.totalorder %s156, 1
        %s160 = scalar_select %p159, %s156, 1
        %s161 = smul.addr %s158, 2
        %s162 = sadd.s32 %s160, %s161
        %s163 = smul.addr %s162, 4
        %s164 = scalar_lea.vmem %s0, %s163
        %s165 = smul.u32 2, %s18
      $region20: #{softmax_lovasz_loss.2} parent=15 // pred_fallthru
        _
      // Predicated region
      $region21: #{softmax_lovasz_loss.2} parent=15 // pred_check
        %p166 = pneg %p72
      $region22: #{softmax_lovasz_loss.2} parent=15 // pred_check_branch
        %168 = sbr.rel (%p166) target = $region24
      $region23: #{softmax_lovasz_loss.2} parent=15 // pred_region
        %s169 = smul.u32 2, %s18
        %p170 = scmp.lt.s32.totalorder %s17, 1
        %s171 = scalar_select %p170, %s17, 1
        %p172 = scmp.lt.s32.totalorder %s169, 1
        %s173 = scalar_select %p172, %s169, 1
        %s174 = smul.addr %s171, 2
        %s175 = sadd.s32 %s173, %s174
        %s176 = scalar_lea.vmem %s1, %s175
        %s177 = smul.u32 2, %s18
      $region24: #{softmax_lovasz_loss.2} parent=15 // pred_fallthru
        _
    $region16: #{softmax_lovasz_loss.2} parent=5 // pred_fallthru
      _
    %p178 = scmp.le.s32.totalorder 1, %s10
    %p179 = scmp.lt.s32.totalorder %s10, 3
    %p180 = pnand %p178, %p179
    %p181 = pneg %p180
    // Predicated region
    $region25: #{softmax_lovasz_loss.2} parent=5 // pred_check
      _
    $region26: #{softmax_lovasz_loss.2} parent=5 // pred_check_branch
      %183 = sbr.rel (%p180) target = $region28
    $region27: #{softmax_lovasz_loss.2} parent=5 // pred_region
      %s184 = ssub.s32 %s10, 1
      %s185 = smul.u32 2, %s20
      %p186 = scmp.lt.s32.totalorder %s19, 1
      %s187 = scalar_select %p186, %s19, 1
      %p188 = scmp.lt.s32.totalorder %s185, 1
      %s189 = scalar_select %p188, %s185, 1
      %s190 = smul.addr %s187, 2
      %s191 = sadd.s32 %s189, %s190
      %s192 = smul.addr %s191, 4
      %s193 = scalar_lea.vmem %s0, %s192
      %p194 = pneg %p50
      %p195 = pneg %p47
      %s196 = smul.u32 2, %s20
      %p197 = scmp.lt.s32.totalorder %s19, 1
      %s198 = scalar_select %p197, %s19, 1
      %p199 = scmp.lt.s32.totalorder %s196, 1
      %s200 = scalar_select %p199, %s196, 1
      %s201 = smul.addr %s198, 2
      %s202 = sadd.s32 %s200, %s201
      %s203 = scalar_lea.vmem %s1, %s202
      %p204 = pneg %p78
      %p205 = pneg %p75
      %p206 = pneg %p106
      %p207 = pneg %p103
      %s208 = sadd.s32 %s19, %s20
      %s209 = smul.u32 2, %s208
      %p210 = scmp.lt.s32.totalorder %s209, 3
      %s211 = scalar_select %p210, %s209, 3
      %s212 = smul.addr %s211, 4
      %s213 = scalar_lea.vmem %s2, %s212
      %p214 = pneg %p134
      %p215 = pneg %p131
      %s216 = sadd.s32 %s19, %s20
      %p217 = scmp.lt.s32.totalorder %s216, 1
      %s218 = scalar_select %p217, %s216, 1
      %s219 = smul.addr %s218, 4
      %s220 = scalar_lea.vmem %s3, %s219
      %s221 = smul.u32 2, %s20
      %p222 = scmp.lt.s32.totalorder %s19, 1
      %s223 = scalar_select %p222, %s19, 1
      %p224 = scmp.lt.s32.totalorder %s221, 1
      %s225 = scalar_select %p224, %s221, 1
      %s226 = smul.addr %s223, 2
      %s227 = sadd.s32 %s225, %s226
      %s228 = smul.addr %s227, 4
      %s229 = scalar_lea.vmem %s0, %s228
      %s230 = smul.u32 2, %s20
      %s231 = smul.u32 2, %s20
      %p232 = scmp.lt.s32.totalorder %s19, 1
      %s233 = scalar_select %p232, %s19, 1
      %p234 = scmp.lt.s32.totalorder %s231, 1
      %s235 = scalar_select %p234, %s231, 1
      %s236 = smul.addr %s233, 2
      %s237 = sadd.s32 %s235, %s236
      %s238 = scalar_lea.vmem %s1, %s237
      %s239 = smul.u32 2, %s20
      %s240 = sadd.s32 %s19, %s20
      %s241 = smul.u32 2, %s240
      %p242 = scmp.lt.s32.totalorder %s241, 3
      %s243 = scalar_select %p242, %s241, 3
      %s244 = smul.addr %s243, 4
      %s245 = scalar_lea.vmem %s2, %s244
      %s246 = sadd.s32 %s19, %s20
      %s247 = smul.u32 2, %s246
      %s248 = sadd.s32 %s19, %s20
      %p249 = scmp.lt.s32.totalorder %s248, 1
      %s250 = scalar_select %p249, %s248, 1
      %s251 = smul.addr %s250, 4
      %s252 = scalar_lea.vmem %s3, %s251
      %s253 = sadd.s32 %s19, %s20
      %v254 = vld [vmem:[%s229] sm:$0xff]
      %v255 = vld [vmem:[%s238] sm:$0x3]
      %v257 = vcombine.high %v254, %v254
      %vm259 = vcmask 1043456
      %v260 = vsel %vm259, %v254, -inf
      %v261 = vrot.slane %v260, 4
      %v262 = vmax.f32 %v260, %v261
      %v263 = vrot.slane %v262, 2
      %v264 = vmax.f32 %v262, %v263
      %v265 = vrot.slane %v264, 1
      %v266 = vmax.f32 %v264, %v265
      %v267 = vsel %vm259, %v257, -inf
      %v268 = vrot.slane %v267, 4
      %v269 = vmax.f32 %v267, %v268
      %v270 = vrot.slane %v269, 2
      %v271 = vmax.f32 %v269, %v270
      %v272 = vrot.slane %v271, 1
      %v273 = vmax.f32 %v271, %v272
      %v276 = vcombine.low %v266, %v273
      %v278 = vsub.f32 %v254, %v276
      %v279 = vmul.f32 %v278, 1.442695
      %v280 = vpow.pop %v279
      %v282 = vcombine.high %v280, %v280
      %v284 = vsel %vm259, %v280, 0.0
      %v285 = vrot.slane %v284, 4
      %v286 = vadd.f32 %v284, %v285
      %v287 = vrot.slane %v286, 2
      %v288 = vadd.f32 %v286, %v287
      %v289 = vrot.slane %v288, 1
      %v290 = vadd.f32 %v288, %v289
      %v291 = vsel %vm259, %v282, 0.0
      %v292 = vrot.slane %v291, 4
      %v293 = vadd.f32 %v291, %v292
      %v294 = vrot.slane %v293, 2
      %v295 = vadd.f32 %v293, %v294
      %v296 = vrot.slane %v295, 1
      %v297 = vadd.f32 %v295, %v296
      %v298 = vrcp.pop %v290
      %v299 = vrcp.pop %v297
      %v300 = vmul.f32 %v290, %v298
      %v301 = vmul.f32 %v297, %v299
      %v302 = vsub.f32 2.0, %v300
      %v303 = vsub.f32 2.0, %v301
      %v304 = vmul.f32 %v298, %v302
      %v305 = vmul.f32 %v299, %v303
      %v308 = vcombine.low %v304, %v305
      %v310 = vmul.f32 %v280, %v308
      %v311 = vlaneseq
      %v312 = vshrl.u32 %v311, 7
      %v313 = vlaneseq
      %v314 = vshrl.u32 %v313, 7
      %v315 = vsub.s32 0, %v314
      %v316 = vrot.slane %v255, %v315
      %v317 = vlaneseq
      %v318 = vshrl.u32 %v317, 7
      %v319 = vsub.s32 1, %v318
      %v320 = vrot.slane %v255, %v319
      %vm321 = vcmp.eq.s32.totalorder %v316, %v312
      %vm322 = vcmp.eq.s32.totalorder %v320, %v312
      %vm323 = vcmp.ge.s32.totalorder %v255, 0
      %v324 = vsel %vm321, 1, 0
      %v325 = vsel %vm322, 1, 0
      %v326 = vsub.f32 1.0, %v310
      %v328 = vcombine.high %v326, %v326
      %v331 = vcombine.high %v310, %v310
      %v333 = vsel %vm321, %v326, %v310
      %v334 = vsel %vm322, %v328, %v331
      %v335 = vsel %vm323, 1, 0
      %v336 = vlaneseq
      %v337 = vshrl.u32 %v336, 7
      %v338 = vsub.s32 0, %v337
      %v339 = vrot.slane %v335, %v338
      %v340 = vlaneseq
      %v341 = vshrl.u32 %v340, 7
      %v342 = vsub.s32 1, %v341
      %v343 = vrot.slane %v335, %v342
      %vm344 = vcmp.eq.s32.totalorder %v339, 1
      %vm345 = vcmp.eq.s32.totalorder %v343, 1
      %v346 = vsel %vm344, %v333, 0.0
      %v347 = vsel %vm345, %v334, 0.0
      %v348 = vsub.f32 0.0, %v346
      %v349 = vsub.f32 0.0, %v347
      %v352 = vand.u32 %v348, 4294967294
      %v353 = vand.u32 %v349, 4294967294
      %v354 = vor.u32 %v352, %v324
      %v355 = vor.u32 %v353, %v325
      %v356 = vcombine.low %v354, %v355
      %358 = vst [vmem:[%s245] sm:$0xff] %v356
      %v359 = vcvt.s32.f32 %v324
      %v360 = vcvt.s32.f32 %v325
      %v361 = vsel %vm259, %v359, 0.0
      %v362 = vsel %vm259, %v360, 0.0
      %v363 = vadd.f32 %v361, %v362
      %364 = vadd.xlane.f32.xlu0 %v363
      %v365 = vpop.xlane.xlu0 %364
      %v366 = vlaneseq
      %v367 = vand.u32 %v366, 127
      %vm368 = vcmp.eq.s32.totalorder %v367, 0
      %v369 = vsel %vm368, %v365, 0.0
      %370 = vst [vmem:[%s252] sm:$0xf] %v369
      %s371 = sadd.s32 %s19, %s20
      %s372 = smul.u32 2, %s371
      %p373 = scmp.lt.s32.totalorder %s372, 3
      %s374 = scalar_select %p373, %s372, 3
      %s375 = smul.addr %s374, 4
      %s376 = scalar_lea.vmem %s2, %s375
      %s377 = sadd.s32 %s19, %s20
      %p378 = scmp.lt.s32.totalorder %s377, 1
      %s379 = scalar_select %p378, %s377, 1
      %s380 = smul.addr %s379, 4
      %s381 = scalar_lea.vmem %s3, %s380
      // Predicated region
      $region29: #{softmax_lovasz_loss.2} parent=27 // pred_check
        %p382 = pneg %p103
      $region30: #{softmax_lovasz_loss.2} parent=27 // pred_check_branch
        %384 = sbr.rel (%p382) target = $region32
      $region31: #{softmax_lovasz_loss.2} parent=27 // pred_region
        %s385 = sadd.s32 %s19, %s20
        %s386 = smul.u32 2, %s385
      $region32: #{softmax_lovasz_loss.2} parent=27 // pred_fallthru
        _
      // Predicated region
      $region33: #{softmax_lovasz_loss.2} parent=27 // pred_check
        %p387 = pneg %p131
      $region34: #{softmax_lovasz_loss.2} parent=27 // pred_check_branch
        %389 = sbr.rel (%p387) target = $region36
      $region35: #{softmax_lovasz_loss.2} parent=27 // pred_region
        %s390 = sadd.s32 %s19, %s20
      $region36: #{softmax_lovasz_loss.2} parent=27 // pred_fallthru
        _
    $region28: #{softmax_lovasz_loss.2} parent=5 // pred_fallthru
      _
    %p391 = scmp.le.s32.totalorder 2, %s10
    // Predicated region
    $region37: #{softmax_lovasz_loss.2} parent=5 // pred_check
      %p392 = pneg %p391
    $region38: #{softmax_lovasz_loss.2} parent=5 // pred_check_branch
      %394 = sbr.rel (%p392) target = $region40
    $region39: #{softmax_lovasz_loss.2} parent=5 // pred_region
      %s395 = ssub.s32 %s10, 2
      // Predicated region
      $region41: #{softmax_lovasz_loss.2} parent=39 // pred_check
        %p396 = pneg %p109
      $region42: #{softmax_lovasz_loss.2} parent=39 // pred_check_branch
        %398 = sbr.rel (%p396) target = $region44
      $region43: #{softmax_lovasz_loss.2} parent=39 // pred_region
        %s399 = sadd.s32 %s21, %s22
        %s400 = smul.u32 2, %s399
        %p401 = scmp.lt.s32.totalorder %s400, 3
        %s402 = scalar_select %p401, %s400, 3
        %s403 = smul.addr %s402, 4
        %s404 = scalar_lea.vmem %s2, %s403
      $region44: #{softmax_lovasz_loss.2} parent=39 // pred_fallthru
        _
      // Predicated region
      $region45: #{softmax_lovasz_loss.2} parent=39 // pred_check
        %p405 = pneg %p137
      $region46: #{softmax_lovasz_loss.2} parent=39 // pred_check_branch
        %407 = sbr.rel (%p405) target = $region48
      $region47: #{softmax_lovasz_loss.2} parent=39 // pred_region
        %s408 = sadd.s32 %s21, %s22
        %p409 = scmp.lt.s32.totalorder %s408, 1
        %s410 = scalar_select %p409, %s408, 1
        %s411 = smul.addr %s410, 4
        %s412 = scalar_lea.vmem %s3, %s411
      $region48: #{softmax_lovasz_loss.2} parent=39 // pred_fallthru
        _
    $region40: #{softmax_lovasz_loss.2} parent=5 // pred_fallthru
      _
  $region6: #{softmax_lovasz_loss.2} parent=0 // loop_footer
    %s14 = sadd.s32 1, %s10
  $region7: #{softmax_lovasz_loss.2} parent=0 // loop_footer_branch
    %9 = sbr.rel target = $region3
  $region8: #{softmax_lovasz_loss.2} parent=0 // loop_exit
    _

// kernel: softmax_lovasz_loss.3
$region0: #{softmax_lovasz_loss.3}
  #allocation0 [shape = 'u32[]', space=smem, size = 0x4, offset = 0x4, fixed_abs, tag = 'smem constant byte address 0x4 - core index']
  #allocation1 [shape = 'u32[144,128]{1,0:T(1,128)}', space=vmem, size = 0x12000, scoped, tag = 'internal scratch']
  #allocation2 [shape = 'f32[4,1]{1,0:T(4,128)}', space=vmem, size = 0x800, scoped, tag = 'scratch operand']
  #allocation3 [shape = 'f32[4,1]{1,0:T(4,128)}', space=vmem, size = 0x800, scoped, tag = 'scratch operand']
  #allocation4 [shape = 'f32[4,1]{1,0:T(4,128)}', space=vmem, size = 0x800, scoped, tag = 'scratch operand']
  %s0 = inlined_call_operand.vmem [shape: f32[4,512], index: 0, kind: input, shape index: {}]
  %s1 = inlined_call_operand.vmem [shape: f32[4,1], index: 1, kind: input, shape index: {}]
  %s2 = inlined_call_operand.hbm [shape: f32[1,1], index: 2, kind: output, shape index: {}]
  %s3 = sld [smem:[#allocation0]]
  $region49: #{softmax_lovasz_loss.3} parent=0
    _
  %s5 = ssub.s32 1, %s3
  %s6 = scalar_select 0, %s5, %s3
  $region1: #{softmax_lovasz_loss.3} parent=0
    #allocation5 [shape = 'u8[512]{0}', space=vmem, size = 0x400, scoped, tag = 'output window, operand 0, single buffered']
    #allocation6 [shape = 's32[2]{0}', space=sflag, size = 0x8, scoped, tag = 'scoped memory for softmax_lovasz_loss.3']
    %7 = vsyncpa [#allocation6], 0
    loop: start=0, step=1, limit=4
    $region2: #{softmax_lovasz_loss.3} parent=1 // loop_pre_header
      _
    $region3: #{softmax_lovasz_loss.3} parent=1 // loop_header
      %s9 = sphi 0, %s13
      %p10 = scmp.ge.s32.totalorder %s9, 4
      %s19 = sphi 0, %s21
      %s22 = sphi 0, %s19
      %s23 = sphi 0, %s22
      %s39 = sphi 0, %s23
      %s43 = sphi 0, %s43
      %s45 = sphi 0, %s43
      %s46 = sphi 0, %s45
      %s60 = sphi 0, %s46
      %s64 = sphi 0, %s64
      %s66 = sphi 0, %s64
      %s67 = sphi 0, %s66
      %s81 = sphi 0, %s67
    $region4: #{softmax_lovasz_loss.3} parent=1 // loop_header_branch
      %12 = sbr.rel (%p10) target = $region8
    $region5: #{softmax_lovasz_loss.3} parent=1 // loop_body
      %s14 = ssub.s32 %s9, 1
      %s15 = ssub.s32 %s9, 2
      %s16 = sadd.s32 %s9, 1
      %s17 = ssub.s32 %s9, %s16
      %p18 = scmp.eq.s32.totalorder %s17, 0
      %s20 = sadd.s32 %s19, 1
      %s21 = scalar_select %p18, %s19, %s20
      %p24 = pneg %p18
      %p25 = scmp.eq.s32.totalorder %s9, 1
      %p26 = por %p24, %p25
      %p27 = scmp.ne.s32.totalorder %s19, %s22
      %p28 = scmp.eq.s32.totalorder %s9, 0
      %p29 = por %p27, %p28
      %p30 = scmp.ne.s32.totalorder %s19, %s22
      %p31 = scmp.eq.s32.totalorder %s14, 1
      %p32 = por %p30, %p31
      %p33 = scmp.ne.s32.totalorder %s22, %s23
      %p34 = scmp.eq.s32.totalorder %s14, 0
      %p35 = por %p33, %p34
      %p36 = scmp.ne.s32.totalorder %s22, %s23
      %p37 = scmp.eq.s32.totalorder %s15, 1
      %p38 = por %p36, %p37
      %p40 = scmp.ne.s32.totalorder %s23, %s39
      %p41 = scmp.eq.s32.totalorder %s15, 0
      %p42 = por %p40, %p41
      %s44 = sadd.s32 %s43, 1
      %p47 = scmp.eq.s32.totalorder %s9, 1
      %p48 = scmp.ne.s32.totalorder %s43, %s45
      %p49 = scmp.eq.s32.totalorder %s9, 0
      %p50 = por %p48, %p49
      %p51 = scmp.ne.s32.totalorder %s43, %s45
      %p52 = scmp.eq.s32.totalorder %s14, 1
      %p53 = por %p51, %p52
      %p54 = scmp.ne.s32.totalorder %s45, %s46
      %p55 = scmp.eq.s32.totalorder %s14, 0
      %p56 = por %p54, %p55
      %p57 = scmp.ne.s32.totalorder %s45, %s46
      %p58 = scmp.eq.s32.totalorder %s15, 1
      %p59 = por %p57, %p58
      %p61 = scmp.ne.s32.totalorder %s46, %s60
      %p62 = scmp.eq.s32.totalorder %s15, 0
      %p63 = por %p61, %p62
      %s65 = sadd.s32 %s64, 1
      %p68 = scmp.eq.s32.totalorder %s9, 1
      %p69 = scmp.ne.s32.totalorder %s64, %s66
      %p70 = scmp.eq.s32.totalorder %s9, 0
      %p71 = por %p69, %p70
      %p72 = scmp.ne.s32.totalorder %s64, %s66
      %p73 = scmp.eq.s32.totalorder %s14, 1
      %p74 = por %p72, %p73
      %p75 = scmp.ne.s32.totalorder %s66, %s67
      %p76 = scmp.eq.s32.totalorder %s14, 0
      %p77 = por %p75, %p76
      %p78 = scmp.ne.s32.totalorder %s66, %s67
      %p79 = scmp.eq.s32.totalorder %s15, 1
      %p80 = por %p78, %p79
      %p82 = scmp.ne.s32.totalorder %s67, %s81
      %p83 = scmp.eq.s32.totalorder %s15, 0
      %p84 = por %p82, %p83
      %p85 = scmp.le.s32.totalorder 1, %s9
      %p86 = scmp.lt.s32.totalorder %s9, 3
      %p87 = pnand %p85, %p86
      %p88 = pneg %p87
      // Predicated region
      $region9: #{softmax_lovasz_loss.3} parent=5 // pred_check
        _
      $region10: #{softmax_lovasz_loss.3} parent=5 // pred_check_branch
        %90 = sbr.rel (%p87) target = $region12
      $region11: #{softmax_lovasz_loss.3} parent=5 // pred_region
        %s91 = ssub.s32 %s9, 1
        // Predicated region
        $region13: #{softmax_lovasz_loss.3} parent=11 // pred_check
          %p92 = pneg %p56
        $region14: #{softmax_lovasz_loss.3} parent=11 // pred_check_branch
          %94 = sbr.rel (%p92) target = $region16
        $region15: #{softmax_lovasz_loss.3} parent=11 // pred_region
          _
        $region16: #{softmax_lovasz_loss.3} parent=11 // pred_fallthru
          _
      $region12: #{softmax_lovasz_loss.3} parent=5 // pred_fallthru
        _
      %p95 = scmp.lt.s32.totalorder %s9, 2
      // Predicated region
      $region17: #{softmax_lovasz_loss.3} parent=5 // pred_check
        %p96 = pneg %p95
      $region18: #{softmax_lovasz_loss.3} parent=5 // pred_check_branch
        %98 = sbr.rel (%p96) target = $region20
      $region19: #{softmax_lovasz_loss.3} parent=5 // pred_region
        // Predicated region
        $region21: #{softmax_lovasz_loss.3} parent=19 // pred_check
          %p99 = pneg %p29
        $region22: #{softmax_lovasz_loss.3} parent=19 // pred_check_branch
          %101 = sbr.rel (%p99) target = $region24
        $region23: #{softmax_lovasz_loss.3} parent=19 // pred_region
          %s102 = smul.u32 2, %s9
          %p103 = scmp.lt.s32.totalorder %s102, 3
          %s104 = scalar_select %p103, %s102, 3
          %s105 = smul.addr %s104, 4
          %s106 = scalar_lea.vmem %s0, %s105
          %s107 = smul.u32 2, %s9
        $region24: #{softmax_lovasz_loss.3} parent=19 // pred_fallthru
          _
      $region20: #{softmax_lovasz_loss.3} parent=5 // pred_fallthru
        _
      %p108 = scmp.le.s32.totalorder 1, %s9
      %p109 = scmp.lt.s32.totalorder %s9, 3
      %p110 = pnand %p108, %p109
      %p111 = pneg %p110
      // Predicated region
      $region25: #{softmax_lovasz_loss.3} parent=5 // pred_check
        _
      $region26: #{softmax_lovasz_loss.3} parent=5 // pred_check_branch
        %113 = sbr.rel (%p110) target = $region28
      $region27: #{softmax_lovasz_loss.3} parent=5 // pred_region
        %s114 = ssub.s32 %s9, 1
        %s115 = smul.u32 2, %s14
        %p116 = scmp.lt.s32.totalorder %s115, 3
        %s117 = scalar_select %p116, %s115, 3
        %s118 = smul.addr %s117, 4
        %s119 = scalar_lea.vmem %s0, %s118
        %p120 = pneg %p35
        %p121 = pneg %p32
        %p122 = pneg %p56
        %p123 = pneg %p53
        %p124 = pneg %p77
        %p125 = pneg %p74
        %s126 = smul.u32 2, %s14
        %p127 = scmp.lt.s32.totalorder %s126, 3
        %s128 = scalar_select %p127, %s126, 3
        %s129 = smul.addr %s128, 4
        %s130 = scalar_lea.vmem %s0, %s129
        %s131 = smul.u32 2, %s14
        %p132 = scmp.eq.s32.totalorder %s14, 0
        // Predicated region
        $region29: #{softmax_lovasz_loss.3} parent=27 // pred_check
          %p133 = pneg %p132
        $region30: #{softmax_lovasz_loss.3} parent=27 // pred_check_branch
          %135 = sbr.rel (%p133) target = $region32
        $region31: #{softmax_lovasz_loss.3} parent=27 // pred_region
          %vm136 = vcmask 3072
          %137 = vst.msk [vmem:[#allocation2] sm:$0xf] %vm136, 0.0
          %138 = vst.msk [vmem:[#allocation3] sm:$0xf] %vm136, 0.0
          %139 = vst.msk [vmem:[#allocation4] sm:$0xf] %vm136, 0.0
        $region32: #{softmax_lovasz_loss.3} parent=27 // pred_fallthru
          _
        %v140 = vld [vmem:[%s130] sm:$0xff]
        %v142 = vcombine.high %v140, %v140
        %v143 = vand.u32 %v140, 1
        %v144 = vand.u32 %v142, 1
        %v145 = vcvt.s32.f32 %v143
        %v146 = vcvt.s32.f32 %v144
        %v147 = vand.u32 %v140, 4294967294
        %v148 = vand.u32 %v142, 4294967294
        %v151 = vsub.f32 0.0, %v147
        %v152 = vsub.f32 0.0, %v148
        %v153 = vld [vmem:[%s1] sm:$0xf]
        %v154 = vlaneseq
        %v155 = vand.u32 %v154, 127
        %v156 = vadd.s32 %v155, 128
        %157 = vrot.lane.b32.xlu0 %v145, 1
        %v158 = vpop.permute.xlu0 %157
        %159 = vrot.lane.b32.xlu0 %v146, 1
        %v160 = vpop.permute.xlu0 %159
        %vm161 = vcmp.lt.s32.totalorder %v155, 1
        %v162 = vsel %vm161, %v158, %v160
        %v163 = vsel %vm161, %v160, %v158
        %vm164 = vcmp.ge.s32.totalorder %v155, 1
        %vm165 = vcmp.ge.s32.totalorder %v156, 1
        %v166 = vsel %vm164, %v163, 0.0
        %v167 = vsel %vm165, %v162, 0.0
        %v168 = vadd.f32 %v145, %v166
        %v169 = vadd.f32 %v146, %v167
        %170 = vrot.lane.b32.xlu0 %v168, 2
        %v171 = vpop.permute.xlu0 %170
        %172 = vrot.lane.b32.xlu0 %v169, 2
        %v173 = vpop.permute.xlu0 %172
        %vm174 = vcmp.lt.s32.totalorder %v155, 2
        %v175 = vsel %vm174, %v171, %v173
        %v176 = vsel %vm174, %v173, %v171
        %vm177 = vcmp.ge.s32.totalorder %v155, 2
        %vm178 = vcmp.ge.s32.totalorder %v156, 2
        %v179 = vsel %vm177, %v176, 0.0
        %v180 = vsel %vm178, %v175, 0.0
        %v181 = vadd.f32 %v168, %v179
        %v182 = vadd.f32 %v169, %v180
        %183 = vrot.lane.b32.xlu0 %v181, 4
        %v184 = vpop.permute.xlu0 %183
        %185 = vrot.lane.b32.xlu0 %v182, 4
        %v186 = vpop.permute.xlu0 %185
        %vm187 = vcmp.lt.s32.totalorder %v155, 4
        %v188 = vsel %vm187, %v184, %v186
        %v189 = vsel %vm187, %v186, %v184
        %vm190 = vcmp.ge.s32.totalorder %v155, 4
        %vm191 = vcmp.ge.s32.totalorder %v156, 4
        %v192 = vsel %vm190, %v189, 0.0
        %v193 = vsel %vm191, %v188, 0.0
        %v194 = vadd.f32 %v181, %v192
        %v195 = vadd.f32 %v182, %v193
        %196 = vrot.lane.b32.xlu0 %v194, 8
        %v197 = vpop.permute.xlu0 %196
        %198 = vrot.lane.b32.xlu0 %v195, 8
        %v199 = vpop.permute.xlu0 %198
        %vm200 = vcmp.lt.s32.totalorder %v155, 8
        %v201 = vsel %vm200, %v197, %v199
        %v202 = vsel %vm200, %v199, %v197
        %vm203 = vcmp.ge.s32.totalorder %v155, 8
        %vm204 = vcmp.ge.s32.totalorder %v156, 8
        %v205 = vsel %vm203, %v202, 0.0
        %v206 = vsel %vm204, %v201, 0.0
        %v207 = vadd.f32 %v194, %v205
        %v208 = vadd.f32 %v195, %v206
        %209 = vrot.lane.b32.xlu0 %v207, 16
        %v210 = vpop.permute.xlu0 %209
        %211 = vrot.lane.b32.xlu0 %v208, 16
        %v212 = vpop.permute.xlu0 %211
        %vm213 = vcmp.lt.s32.totalorder %v155, 16
        %v214 = vsel %vm213, %v210, %v212
        %v215 = vsel %vm213, %v212, %v210
        %vm216 = vcmp.ge.s32.totalorder %v155, 16
        %vm217 = vcmp.ge.s32.totalorder %v156, 16
        %v218 = vsel %vm216, %v215, 0.0
        %v219 = vsel %vm217, %v214, 0.0
        %v220 = vadd.f32 %v207, %v218
        %v221 = vadd.f32 %v208, %v219
        %222 = vrot.lane.b32.xlu0 %v220, 32
        %v223 = vpop.permute.xlu0 %222
        %224 = vrot.lane.b32.xlu0 %v221, 32
        %v225 = vpop.permute.xlu0 %224
        %vm226 = vcmp.lt.s32.totalorder %v155, 32
        %v227 = vsel %vm226, %v223, %v225
        %v228 = vsel %vm226, %v225, %v223
        %vm229 = vcmp.ge.s32.totalorder %v155, 32
        %vm230 = vcmp.ge.s32.totalorder %v156, 32
        %v231 = vsel %vm229, %v228, 0.0
        %v232 = vsel %vm230, %v227, 0.0
        %v233 = vadd.f32 %v220, %v231
        %v234 = vadd.f32 %v221, %v232
        %235 = vrot.lane.b32.xlu0 %v233, 64
        %v236 = vpop.permute.xlu0 %235
        %237 = vrot.lane.b32.xlu0 %v234, 64
        %v238 = vpop.permute.xlu0 %237
        %vm239 = vcmp.lt.s32.totalorder %v155, 64
        %v240 = vsel %vm239, %v236, %v238
        %v241 = vsel %vm239, %v238, %v236
        %vm242 = vcmp.ge.s32.totalorder %v155, 64
        %vm243 = vcmp.ge.s32.totalorder %v156, 64
        %v244 = vsel %vm242, %v241, 0.0
        %v245 = vsel %vm243, %v240, 0.0
        %v246 = vadd.f32 %v233, %v244
        %v247 = vadd.f32 %v234, %v245
        %vm248 = vcmp.ge.s32.totalorder %v155, 128
        %vm249 = vcmp.ge.s32.totalorder %v156, 128
        %v250 = vsel %vm248, %v247, 0.0
        %v251 = vsel %vm249, %v246, 0.0
        %v252 = vadd.f32 %v246, %v250
        %v253 = vadd.f32 %v247, %v251
        %v254 = vld [vmem:[#allocation2] sm:$0xf]
        %256 = vset.pattern.permute.xlu0 0
        %257 = vperm.xlu0 %256, %v254
        %v258 = vpop.permute.xlu0 %257
        %v260 = vadd.f32 %v252, %v258
        %v261 = vadd.f32 %v253, %v258
        %s262 = smul.u32 %s14, 256
        %s263 = sadd.s32 %s262, 1
        %v264 = vstv %s263
        %v265 = vadd.s32 %v155, %v264
        %v266 = vadd.s32 %v156, %v264
        %v267 = vcvt.s32.f32 %v265
        %v268 = vcvt.s32.f32 %v266
        %270 = vset.pattern.permute.xlu0 0
        %271 = vperm.xlu0 %270, %v153
        %v272 = vpop.permute.xlu0 %271
        %v274 = vsub.f32 %v272, %v260
        %v275 = vsub.f32 %v272, %v261
        %v276 = vsub.f32 %v267, %v260
        %v277 = vsub.f32 %v268, %v261
        %v278 = vadd.f32 %v272, %v276
        %v279 = vadd.f32 %v272, %v277
        %v280 = vrcp.pop %v278
        %v281 = vrcp.pop %v279
        %v282 = vmul.f32 %v274, %v280
        %v283 = vmul.f32 %v275, %v281
        %v284 = vsub.f32 1.0, %v282
        %v285 = vsub.f32 1.0, %v283
        %286 = vrot.lane.b32.xlu0 %v284, 1
        %v287 = vpop.permute.xlu0 %286
        %288 = vrot.lane.b32.xlu0 %v285, 1
        %v289 = vpop.permute.xlu0 %288
        %v290 = vsel %vm161, %v287, %v289
        %v291 = vsel %vm161, %v289, %v287
        %vm292 = vcmp.eq.s32.totalorder %v155, 0
        %vm293 = vcmp.eq.s32.totalorder %v156, 0
        %v294 = vld [vmem:[#allocation3] sm:$0xf]
        %296 = vset.pattern.permute.xlu0 0
        %297 = vperm.xlu0 %296, %v294
        %v298 = vpop.permute.xlu0 %297
        %v300 = vsel %vm292, %v298, %v291
        %v301 = vsel %vm293, %v298, %v290
        %v302 = vsub.f32 %v284, %v300
        %v303 = vsub.f32 %v285, %v301
        %v304 = vld [vmem:[#allocation4] sm:$0xf]
        %v305 = vmul.f32 %v151, %v302
        %v306 = vmul.f32 %v152, %v303
        %vm307 = vcmask 1043456
        %v308 = vsel %vm307, %v305, 0.0
        %v309 = vsel %vm307, %v306, 0.0
        %v310 = vadd.f32 %v308, %v309
        %311 = vadd.xlane.f32.xlu0 %v310
        %v312 = vpop.xlane.xlu0 %311
        %v313 = vadd.f32 %v304, %v312
        %vm314 = vcmask 3072
        %315 = vst.msk [vmem:[#allocation4] sm:$0xf] %vm314, %v313
        %v316 = vsel %vm307, %v145, 0.0
        %v317 = vsel %vm307, %v146, 0.0
        %v318 = vadd.f32 %v316, %v317
        %319 = vadd.xlane.f32.xlu0 %v318
        %v320 = vpop.xlane.xlu0 %319
        %v321 = vadd.f32 %v254, %v320
        %322 = vst.msk [vmem:[#allocation2] sm:$0xf] %vm314, %v321
        %s323 = sadd.s32 %s262, 256
        %s324 = scvt.s32.f32 %s323
        %v325 = vstv %s324
        %v326 = vsub.f32 %v325, %v321
        %v327 = vadd.f32 %v153, %v326
        %v328 = vsub.f32 %v153, %v321
        %v329 = vrcp.pop %v327
        %v330 = vmul.f32 %v328, %v329
        %v331 = vsub.f32 1.0, %v330
        %332 = vst.msk [vmem:[#allocation3] sm:$0xf] %vm314, %v331
        %p333 = scmp.eq.s32.totalorder %s14, 1
        // Predicated region
        $region33: #{softmax_lovasz_loss.3} parent=27 // pred_check
          %p334 = pneg %p333
        $region34: #{softmax_lovasz_loss.3} parent=27 // pred_check_branch
          %336 = sbr.rel (%p334) target = $region36
        $region35: #{softmax_lovasz_loss.3} parent=27 // pred_region
          %vm337 = vcmp.gt.f32.partialorder %v153, 0.0
          %v338 = vsel %vm337, 1, 0
          %v339 = vcvt.s32.f32 %v338
          %v340 = vld [vmem:[#allocation4] sm:$0xf]
          %v341 = vmul.f32 %v340, %v339
          %v342 = vsel %vm314, %v341, 0.0
          %343 = vadd.xlane.f32.xlu0 %v342
          %v344 = vpop.xlane.xlu0 %343
          %v345 = vrot.slane %v344, 4
          %v346 = vadd.f32 %v344, %v345
          %v347 = vrot.slane %v346, 2
          %v348 = vadd.f32 %v346, %v347
          %v349 = vrot.slane %v348, 1
          %v350 = vadd.f32 %v348, %v349
          %s351 = vtos %v350
          %v352 = vsel %vm314, %v339, 0.0
          %353 = vadd.xlane.f32.xlu0 %v352
          %v354 = vpop.xlane.xlu0 %353
          %v355 = vrot.slane %v354, 4
          %v356 = vadd.f32 %v354, %v355
          %v357 = vrot.slane %v356, 2
          %v358 = vadd.f32 %v356, %v357
          %v359 = vrot.slane %v358, 1
          %v360 = vadd.f32 %v358, %v359
          %s361 = vtos %v360
          %v362 = vstv %s361
          %v363 = vrcp.pop %v362
          %s364 = vtos %v363
          %s365 = smul.f32 %s351, %s364
          %v366 = vstv %s365
          %vm367 = vcmask 0
          %368 = vst.msk [vmem:[#allocation5] sm:$0x1] %vm367, %v366
        $region36: #{softmax_lovasz_loss.3} parent=27 // pred_fallthru
          _
        // Predicated region
        $region37: #{softmax_lovasz_loss.3} parent=27 // pred_check
          %p369 = pneg %p74
        $region38: #{softmax_lovasz_loss.3} parent=27 // pred_check_branch
          %371 = sbr.rel (%p369) target = $region40
        $region39: #{softmax_lovasz_loss.3} parent=27 // pred_region
          %s373 = ssub.s32 16, 16
          %374 = vsyncadd [#allocation6], %s373
          %s376 = sshll.u32 [#allocation5], 4
          %s377 = int_to_ptr.vmem [resolvable:$true] %s376
          %379 = dma.vmem_to_hbm [thread:$0]  %s377, 16, %s2, [#allocation6]
        $region40: #{softmax_lovasz_loss.3} parent=27 // pred_fallthru
          _
        // Predicated region
        $region41: #{softmax_lovasz_loss.3} parent=27 // pred_check
          %p380 = pneg %p74
        $region42: #{softmax_lovasz_loss.3} parent=27 // pred_check_branch
          %382 = sbr.rel (%p380) target = $region44
        $region43: #{softmax_lovasz_loss.3} parent=27 // pred_region
          %383 = dma.done [#allocation6], 16
        $region44: #{softmax_lovasz_loss.3} parent=27 // pred_fallthru
          _
      $region28: #{softmax_lovasz_loss.3} parent=5 // pred_fallthru
        _
      %p384 = scmp.le.s32.totalorder 2, %s9
      // Predicated region
      $region45: #{softmax_lovasz_loss.3} parent=5 // pred_check
        %p385 = pneg %p384
      $region46: #{softmax_lovasz_loss.3} parent=5 // pred_check_branch
        %387 = sbr.rel (%p385) target = $region48
      $region47: #{softmax_lovasz_loss.3} parent=5 // pred_region
        %s388 = ssub.s32 %s9, 2
      $region48: #{softmax_lovasz_loss.3} parent=5 // pred_fallthru
        _
    $region6: #{softmax_lovasz_loss.3} parent=1 // loop_footer
      %s13 = sadd.s32 1, %s9
    $region7: #{softmax_lovasz_loss.3} parent=1 // loop_footer_branch
      %8 = sbr.rel target = $region3
    $region8: #{softmax_lovasz_loss.3} parent=1 // loop_exit
      _
    %389 = vsyncpa [#allocation6], 1
    %s390 = scalar_lea.sflag [#allocation6], 1
    %391 = vsyncpa %s390, 1

</llo_original>
